<compile_context>
chip_gen: v7x
topology: tpu7x:2x2x1
jax: 0.10.0
libtpu: 0.0.40
codegen_flags: <defaults>
</compile_context>

<pallas_src>
import math

import jax
import jax.numpy as jnp
from jax.experimental import pallas as pl
from jax.experimental.pallas import tpu as pltpu


def _copy_kernel(x_ref, o_ref):
    # x_ref: (1, 1, Cb, w*h)  -- one patch, a block of Cb channels, flat plane
    # o_ref: (1, Cb, w*h)     -- same data, placed at (channel-block row,
    #                            column window pi*w*h) of the merged image
    o_ref[...] = x_ref[0]


def _pick_channel_block(c, plane_bytes, target_bytes=2 * 1024 * 1024):
    """Largest divisor of c that is a multiple of 8 (or c itself) and whose
    per-buffer block stays <= target_bytes (VMEM-safe on v5e/v6e/v7x)."""
    cands = [d for d in range(1, c + 1) if c % d == 0 and (d % 8 == 0 or d == c)]
    fitting = [d for d in cands if d * plane_bytes <= target_bytes]
    return max(fitting) if fitting else min(cands)


def part_e_forward(imgs, patch_num):
    """imgs: (b, c, w, h) NCHW -> (b//patch_num, c, w*s, h*s) NCHW, s=sqrt(patch_num)."""
    b, c, w, h = imgs.shape
    s = int(math.isqrt(patch_num))
    assert s * s == patch_num, "patch_num must be a perfect square"
    assert b % patch_num == 0, "batch must be divisible by patch_num"
    p = patch_num
    B = b // p
    wh = w * h
    Wp, Hp = w * s, h * s

    if wh % 128 != 0:
        # TODO(synk): lane-dense Pallas path needs (w*h) % 128 == 0; for odd
        # planes fall back to the equivalent pure-layout formulation.
        x = jnp.transpose(imgs, (0, 2, 3, 1)).reshape(B, Wp, Hp, c)
        return jnp.transpose(x, (0, 3, 1, 2))

    itemsize = jnp.dtype(imgs.dtype).itemsize
    Cb = _pick_channel_block(c, wh * itemsize)
    n_cb = c // Cb

    # Free (contiguous) reshape: (b, c, w, h) -> (B, p, c, w*h).
    x = imgs.reshape(B, p, c, wh)

    y = pl.pallas_call(
        _copy_kernel,
        out_shape=jax.ShapeDtypeStruct((B, c, p * wh), imgs.dtype),
        grid_spec=pltpu.PrefetchScalarGridSpec(
            num_scalar_prefetch=0,
            grid=(B, p, n_cb),
            in_specs=[
                # (Bi, pi, cb) -> patch (Bi, pi), channels [cb*Cb, (cb+1)*Cb)
                pl.BlockSpec((1, 1, Cb, wh), lambda Bi, pi, cb: (Bi, pi, cb, 0)),
            ],
            # same channel block, column window [pi*wh, (pi+1)*wh) of the merged
            # per-channel image (last block dim wh is a multiple of 128 -> dense vst)
            out_specs=pl.BlockSpec((1, Cb, wh), lambda Bi, pi, cb: (Bi, cb, pi)),
        ),
        compiler_params=pltpu.CompilerParams(
            dimension_semantics=("parallel", "parallel", "parallel"),
            vmem_limit_bytes=32 * 1024 * 1024,
        ),
        cost_estimate=pl.CostEstimate(
            flops=0,
            transcendentals=0,
            bytes_accessed=2 * imgs.size * itemsize,
        ),
    )(x)

    # Free (contiguous) reshape: (B, c, p*w*h) -> (B, c, w*s, h*s).
    return y.reshape(B, c, Wp, Hp)


def _reference(imgs, patch_num):
    # direct transcription of the PyTorch forward in plain jnp
    b, c, w, h = imgs.shape
    s = int(patch_num ** 0.5)
    x = jnp.transpose(imgs, (0, 2, 3, 1))
    x = x.reshape(b // patch_num, w * s, h * s, c)
    return jnp.transpose(x, (0, 3, 1, 2))


if __name__ == "__main__":
    patch_num = 4
    b, c, w, h = 8, 4, 16, 16  # 8 patches -> 2 super-images of (4, 32, 32)

    key = jax.random.PRNGKey(0)
    imgs = jax.random.normal(key, (b, c, w, h), dtype=jnp.float32)

    fwd = jax.jit(part_e_forward, static_argnums=1)
    out = fwd(imgs, patch_num)
    out = jax.block_until_ready(out)

    ref = _reference(imgs, patch_num)
    assert out.shape == (b // patch_num, c, w * 2, h * 2), out.shape
    assert out.dtype == imgs.dtype
    assert bool(jnp.array_equal(out, ref)), "mismatch vs. reference"

    print("KERNEL_OK")
</pallas_src>

<mosaic_0001>
module attributes {stable_mosaic.version = 11 : i64} {
  func.func @_copy_kernel(%arg0: i32, %arg1: i32, %arg2: i32, %arg3: memref<1x1x4x256xf32, #tpu.memory_space<vmem>>, %arg4: memref<1x4x256xf32, #tpu.memory_space<vmem>>) attributes {dimension_semantics = [#tpu.dimension_semantics<parallel>, #tpu.dimension_semantics<parallel>, #tpu.dimension_semantics<parallel>], iteration_bounds = array<i64: 2, 4, 1>, scalar_prefetch = 0 : i64, scratch_operands = 0 : i64, tpu.core_type = #tpu.core_type<tc>, window_params = [{transform_indices = @transform_0, window_bounds = array<i64: 1, 1, 4, 256>}, {transform_indices = @transform_1, window_bounds = array<i64: 1, 4, 256>}]} {
    %c0 = arith.constant 0 : index
    %c0_0 = arith.constant 0 : index
    %c0_1 = arith.constant 0 : index
    %c0_2 = arith.constant 0 : index
    %0 = vector.load %arg3[%c0, %c0_0, %c0_1, %c0_2] : memref<1x1x4x256xf32, #tpu.memory_space<vmem>>, vector<1x1x4x256xf32>
    %1 = vector.shape_cast %0 : vector<1x1x4x256xf32> to vector<1x4x256xf32>
    %c0_3 = arith.constant 0 : index
    %c0_4 = arith.constant 0 : index
    %c0_5 = arith.constant 0 : index
    %2 = vector.load %arg4[%c0_3, %c0_4, %c0_5] : memref<1x4x256xf32, #tpu.memory_space<vmem>>, vector<1x4x256xf32>
    tpu.vector_store %arg4[%c0_3, %c0_4, %c0_5], %1 {strides = array<i32>} : memref<1x4x256xf32, #tpu.memory_space<vmem>>, vector<1x4x256xf32>,
    return
  }
  func.func @transform_0(%arg0: i32, %arg1: i32, %arg2: i32) -> (i32, i32, i32, i32) {
    %c0_i32 = arith.constant 0 : i32
    %c0_i32_0 = arith.constant 0 : i32
    return %arg0, %arg1, %arg2, %c0_i32 : i32, i32, i32, i32
  }
  func.func @transform_1(%arg0: i32, %arg1: i32, %arg2: i32) -> (i32, i32, i32) {
    %c0_i32 = arith.constant 0 : i32
    return %arg0, %arg2, %arg1 : i32, i32, i32
  }
}

</mosaic_0001>

<llo_original>
// kernel: part_e_forward.1
$region0: #{part_e_forward.1}
  #allocation0 [shape = 'u32[]', space=smem, size = 0x4, offset = 0x4, fixed_abs, tag = 'smem constant byte address 0x4 - core index']
  #allocation1 [shape = 'u32[144,128]{1,0:T(1,128)}', space=vmem, size = 0x12000, scoped, tag = 'internal scratch']
  %s0 = inlined_call_operand.vmem [shape: f32[2,4,4,256], index: 0, kind: input, shape index: {}]
  %s1 = inlined_call_operand.vmem [shape: f32[2,4,1024], index: 1, kind: output, shape index: {}]
  %s2 = sld [smem:[#allocation0]]
  $region37: #{part_e_forward.1} parent=0
    _
  %s4 = ssub.s32 1, %s2
  %s5 = scalar_select 0, %s4, %s2
  loop: start=0, step=1, limit=10
  $region2: #{part_e_forward.1} parent=0 // loop_pre_header
    _
  $region3: #{part_e_forward.1} parent=0 // loop_header
    %s7 = sphi 0, %s11
    %p8 = scmp.ge.s32.totalorder %s7, 10
    %s14 = sphi 0, %s33
    %s15 = sphi 0, %s29
    %s16 = sphi 0, %s25
    %s17 = sphi 0, %s14
    %s18 = sphi 0, %s15
    %s19 = sphi 0, %s16
    %s20 = sphi 0, %s17
    %s21 = sphi 0, %s18
    %s22 = sphi 0, %s19
    %s40 = sphi 0, %s42
    %s43 = sphi 0, %s40
    %s44 = sphi 0, %s43
    %s60 = sphi 0, %s44
    %s70 = sphi 0, %s72
    %s73 = sphi 0, %s70
    %s74 = sphi 0, %s73
    %s90 = sphi 0, %s74
  $region4: #{part_e_forward.1} parent=0 // loop_header_branch
    %10 = sbr.rel (%p8) target = $region8
  $region5: #{part_e_forward.1} parent=0 // loop_body
    %s12 = ssub.s32 %s7, 1
    %s13 = ssub.s32 %s7, 2
    %s23 = sadd.s32 1, %s16
    %p24 = scmp.ge.s32.totalorder %s23, 1
    %s25 = scalar_select %p24, 0, %s23
    %s26 = sadd.s32 1, %s15
    %s27 = scalar_select %p24, %s26, %s15
    %p28 = scmp.ge.s32.totalorder %s27, 4
    %s29 = scalar_select %p28, 0, %s27
    %s30 = sadd.s32 1, %s14
    %s31 = scalar_select %p28, %s30, %s14
    %p32 = scmp.ge.s32.totalorder %s31, 2
    %s33 = scalar_select %p32, 0, %s31
    %s34 = ssub.s32 %s14, %s33
    %s35 = ssub.s32 %s15, %s29
    %s36 = sor.u32 %s34, %s35
    %s37 = ssub.s32 %s16, %s25
    %s38 = sor.u32 %s36, %s37
    %p39 = scmp.eq.s32.totalorder %s38, 0
    %s41 = sadd.s32 %s40, 1
    %s42 = scalar_select %p39, %s40, %s41
    %p45 = pneg %p39
    %p46 = scmp.eq.s32.totalorder %s7, 7
    %p47 = por %p45, %p46
    %p48 = scmp.ne.s32.totalorder %s40, %s43
    %p49 = scmp.eq.s32.totalorder %s7, 0
    %p50 = por %p48, %p49
    %p51 = scmp.ne.s32.totalorder %s40, %s43
    %p52 = scmp.eq.s32.totalorder %s12, 7
    %p53 = por %p51, %p52
    %p54 = scmp.ne.s32.totalorder %s43, %s44
    %p55 = scmp.eq.s32.totalorder %s12, 0
    %p56 = por %p54, %p55
    %p57 = scmp.ne.s32.totalorder %s43, %s44
    %p58 = scmp.eq.s32.totalorder %s13, 7
    %p59 = por %p57, %p58
    %p61 = scmp.ne.s32.totalorder %s44, %s60
    %p62 = scmp.eq.s32.totalorder %s13, 0
    %p63 = por %p61, %p62
    %s64 = ssub.s32 %s14, %s33
    %s65 = ssub.s32 %s16, %s25
    %s66 = sor.u32 %s64, %s65
    %s67 = ssub.s32 %s15, %s29
    %s68 = sor.u32 %s66, %s67
    %p69 = scmp.eq.s32.totalorder %s68, 0
    %s71 = sadd.s32 %s70, 1
    %s72 = scalar_select %p69, %s70, %s71
    %p75 = pneg %p69
    %p76 = scmp.eq.s32.totalorder %s7, 7
    %p77 = por %p75, %p76
    %p78 = scmp.ne.s32.totalorder %s70, %s73
    %p79 = scmp.eq.s32.totalorder %s7, 0
    %p80 = por %p78, %p79
    %p81 = scmp.ne.s32.totalorder %s70, %s73
    %p82 = scmp.eq.s32.totalorder %s12, 7
    %p83 = por %p81, %p82
    %p84 = scmp.ne.s32.totalorder %s73, %s74
    %p85 = scmp.eq.s32.totalorder %s12, 0
    %p86 = por %p84, %p85
    %p87 = scmp.ne.s32.totalorder %s73, %s74
    %p88 = scmp.eq.s32.totalorder %s13, 7
    %p89 = por %p87, %p88
    %p91 = scmp.ne.s32.totalorder %s74, %s90
    %p92 = scmp.eq.s32.totalorder %s13, 0
    %p93 = por %p91, %p92
    %p94 = scmp.le.s32.totalorder 1, %s7
    %p95 = scmp.lt.s32.totalorder %s7, 9
    %p96 = pnand %p94, %p95
    %p97 = pneg %p96
    // Predicated region
    $region9: #{part_e_forward.1} parent=5 // pred_check
      _
    $region10: #{part_e_forward.1} parent=5 // pred_check_branch
      %99 = sbr.rel (%p96) target = $region12
    $region11: #{part_e_forward.1} parent=5 // pred_region
      %s100 = ssub.s32 %s7, 1
    $region12: #{part_e_forward.1} parent=5 // pred_fallthru
      _
    %p101 = scmp.lt.s32.totalorder %s7, 8
    // Predicated region
    $region13: #{part_e_forward.1} parent=5 // pred_check
      %p102 = pneg %p101
    $region14: #{part_e_forward.1} parent=5 // pred_check_branch
      %104 = sbr.rel (%p102) target = $region16
    $region15: #{part_e_forward.1} parent=5 // pred_region
      // Predicated region
      $region17: #{part_e_forward.1} parent=15 // pred_check
        %p105 = pneg %p50
      $region18: #{part_e_forward.1} parent=15 // pred_check_branch
        %107 = sbr.rel (%p105) target = $region20
      $region19: #{part_e_forward.1} parent=15 // pred_region
        %p108 = scmp.lt.s32.totalorder %s14, 1
        %s109 = scalar_select %p108, %s14, 1
        %p110 = scmp.lt.s32.totalorder %s15, 3
        %s111 = scalar_select %p110, %s15, 3
        %p112 = scmp.lt.s32.totalorder %s16, 0
        %s113 = scalar_select %p112, %s16, 0
        %s114 = smul.addr %s113, 2
        %s115 = smul.addr %s111, 2
        %s116 = sadd.s32 %s114, %s115
        %s117 = smul.addr %s109, 8
        %s118 = sadd.s32 %s116, %s117
        %s119 = smul.addr %s118, 4
        %s120 = scalar_lea.vmem %s0, %s119
      $region20: #{part_e_forward.1} parent=15 // pred_fallthru
        _
    $region16: #{part_e_forward.1} parent=5 // pred_fallthru
      _
    %p121 = scmp.le.s32.totalorder 1, %s7
    %p122 = scmp.lt.s32.totalorder %s7, 9
    %p123 = pnand %p121, %p122
    %p124 = pneg %p123
    // Predicated region
    $region21: #{part_e_forward.1} parent=5 // pred_check
      _
    $region22: #{part_e_forward.1} parent=5 // pred_check_branch
      %126 = sbr.rel (%p123) target = $region24
    $region23: #{part_e_forward.1} parent=5 // pred_region
      %s127 = ssub.s32 %s7, 1
      %p128 = scmp.lt.s32.totalorder %s17, 1
      %s129 = scalar_select %p128, %s17, 1
      %p130 = scmp.lt.s32.totalorder %s18, 3
      %s131 = scalar_select %p130, %s18, 3
      %p132 = scmp.lt.s32.totalorder %s19, 0
      %s133 = scalar_select %p132, %s19, 0
      %s134 = smul.addr %s133, 2
      %s135 = smul.addr %s131, 2
      %s136 = sadd.s32 %s134, %s135
      %s137 = smul.addr %s129, 8
      %s138 = sadd.s32 %s136, %s137
      %s139 = smul.addr %s138, 4
      %s140 = scalar_lea.vmem %s0, %s139
      %p141 = pneg %p56
      %p142 = pneg %p53
      %p143 = pneg %p86
      %p144 = pneg %p83
      %s145 = smul.u32 2, %s18
      %p146 = scmp.lt.s32.totalorder %s17, 1
      %s147 = scalar_select %p146, %s17, 1
      %p148 = scmp.lt.s32.totalorder %s19, 0
      %s149 = scalar_select %p148, %s19, 0
      %p150 = scmp.lt.s32.totalorder %s145, 7
      %s151 = scalar_select %p150, %s145, 7
      %s152 = smul.addr %s149, 8
      %s153 = sadd.s32 %s151, %s152
      %s154 = smul.addr %s147, 8
      %s155 = sadd.s32 %s153, %s154
      %s156 = smul.addr %s155, 4
      %s157 = scalar_lea.vmem %s1, %s156
      %p158 = scmp.lt.s32.totalorder %s17, 1
      %s159 = scalar_select %p158, %s17, 1
      %p160 = scmp.lt.s32.totalorder %s18, 3
      %s161 = scalar_select %p160, %s18, 3
      %p162 = scmp.lt.s32.totalorder %s19, 0
      %s163 = scalar_select %p162, %s19, 0
      %s164 = smul.addr %s163, 2
      %s165 = smul.addr %s161, 2
      %s166 = sadd.s32 %s164, %s165
      %s167 = smul.addr %s159, 8
      %s168 = sadd.s32 %s166, %s167
      %s169 = smul.addr %s168, 4
      %s170 = scalar_lea.vmem %s0, %s169
      %s171 = smul.u32 2, %s18
      %p172 = scmp.lt.s32.totalorder %s17, 1
      %s173 = scalar_select %p172, %s17, 1
      %p174 = scmp.lt.s32.totalorder %s19, 0
      %s175 = scalar_select %p174, %s19, 0
      %p176 = scmp.lt.s32.totalorder %s171, 7
      %s177 = scalar_select %p176, %s171, 7
      %s178 = smul.addr %s175, 8
      %s179 = sadd.s32 %s177, %s178
      %s180 = smul.addr %s173, 8
      %s181 = sadd.s32 %s179, %s180
      %s182 = smul.addr %s181, 4
      %s183 = scalar_lea.vmem %s1, %s182
      %s184 = smul.u32 2, %s18
      %v185 = vld [vmem:[%s170] sm:$0xff]
      %186 = vst [vmem:[%s183] sm:$0xff] %v185
      %s187 = smul.u32 2, %s18
      %p188 = scmp.lt.s32.totalorder %s17, 1
      %s189 = scalar_select %p188, %s17, 1
      %p190 = scmp.lt.s32.totalorder %s19, 0
      %s191 = scalar_select %p190, %s19, 0
      %p192 = scmp.lt.s32.totalorder %s187, 7
      %s193 = scalar_select %p192, %s187, 7
      %s194 = smul.addr %s191, 8
      %s195 = sadd.s32 %s193, %s194
      %s196 = smul.addr %s189, 8
      %s197 = sadd.s32 %s195, %s196
      %s198 = smul.addr %s197, 4
      %s199 = scalar_lea.vmem %s1, %s198
      // Predicated region
      $region25: #{part_e_forward.1} parent=23 // pred_check
        %p200 = pneg %p83
      $region26: #{part_e_forward.1} parent=23 // pred_check_branch
        %202 = sbr.rel (%p200) target = $region28
      $region27: #{part_e_forward.1} parent=23 // pred_region
        %s203 = smul.u32 2, %s18
      $region28: #{part_e_forward.1} parent=23 // pred_fallthru
        _
    $region24: #{part_e_forward.1} parent=5 // pred_fallthru
      _
    %p204 = scmp.le.s32.totalorder 2, %s7
    // Predicated region
    $region29: #{part_e_forward.1} parent=5 // pred_check
      %p205 = pneg %p204
    $region30: #{part_e_forward.1} parent=5 // pred_check_branch
      %207 = sbr.rel (%p205) target = $region32
    $region31: #{part_e_forward.1} parent=5 // pred_region
      %s208 = ssub.s32 %s7, 2
      // Predicated region
      $region33: #{part_e_forward.1} parent=31 // pred_check
        %p209 = pneg %p89
      $region34: #{part_e_forward.1} parent=31 // pred_check_branch
        %211 = sbr.rel (%p209) target = $region36
      $region35: #{part_e_forward.1} parent=31 // pred_region
        %s212 = smul.u32 2, %s21
        %p213 = scmp.lt.s32.totalorder %s20, 1
        %s214 = scalar_select %p213, %s20, 1
        %p215 = scmp.lt.s32.totalorder %s22, 0
        %s216 = scalar_select %p215, %s22, 0
        %p217 = scmp.lt.s32.totalorder %s212, 7
        %s218 = scalar_select %p217, %s212, 7
        %s219 = smul.addr %s216, 8
        %s220 = sadd.s32 %s218, %s219
        %s221 = smul.addr %s214, 8
        %s222 = sadd.s32 %s220, %s221
        %s223 = smul.addr %s222, 4
        %s224 = scalar_lea.vmem %s1, %s223
      $region36: #{part_e_forward.1} parent=31 // pred_fallthru
        _
    $region32: #{part_e_forward.1} parent=5 // pred_fallthru
      _
  $region6: #{part_e_forward.1} parent=0 // loop_footer
    %s11 = sadd.s32 1, %s7
  $region7: #{part_e_forward.1} parent=0 // loop_footer_branch
    %6 = sbr.rel target = $region3
  $region8: #{part_e_forward.1} parent=0 // loop_exit
    _

</llo_original>
